<compile_context>
chip_gen: v5e
topology: v5e:2x2
jax: 0.10.0
libtpu: 0.0.40
codegen_flags: <defaults>
</compile_context>

<pallas_src>
import jax
import jax.numpy as jnp
from jax.experimental import pallas as pl
from jax.experimental.pallas import tpu as pltpu


def _round_up(x: int, m: int) -> int:
    return ((x + m - 1) // m) * m


def _vmem_capacity_bytes(default: int = 64 * 1024 * 1024) -> int:
    # Conservative default (v7x-sized) if the query is unavailable.
    try:
        info = pltpu.get_tpu_info()
        for attr in ("vmem_capacity_bytes", "vmem_bytes", "vmem_size_bytes"):
            v = getattr(info, attr, None)
            if v:
                return int(v)
    except Exception:
        pass
    return default


def network_kernel(states_ref, coords_ref, pw1t_ref, pw2t_ref,
                   mw1_ref, mb1_ref, mw2_ref, mb2_ref,
                   hws_ref, hwp_ref, hb_ref, pb2_ref,
                   out_ref, pcmax_ref):
    j = pl.program_id(1)              # point-tile index (reduction axis)
    nj = pl.num_programs(1)

    # ---- once per batch tile: state MLP branch + accumulator init ----------
    @pl.when(j == 0)
    def _init():
        st = states_ref[...]                                              # [Din, Bt]
        h = jnp.dot(mw1_ref[...], st, preferred_element_type=jnp.float32) + mb1_ref[...]
        h = jnp.maximum(h, 0.0)
        se = jnp.dot(mw2_ref[...], h, preferred_element_type=jnp.float32) + mb2_ref[...]
        # State contribution to the head output (head weight is pre-split, so
        # no concat of [state_emb | pc_emb] is ever materialized).
        out_ref[...] = (jnp.dot(hws_ref[...], se,
                                preferred_element_type=jnp.float32) + hb_ref[...])
        # Running max over points starts at -inf (exact for all-negative rows).
        pcmax_ref[...] = jnp.full(pcmax_ref.shape, -jnp.inf, pcmax_ref.dtype)

    # ---- pointcloud branch on this tile of points ---------------------------
    # coords_ref: [4, M] bf16, M = Nt*Bt, columns are (point-major, batch-minor),
    # rows are (x, y, z, 1).  Both dots are standard-form bf16 MXU matmuls.
    c = coords_ref[...]                                                    # [4, M]
    h1 = jnp.dot(pw1t_ref[...], c, preferred_element_type=jnp.float32)     # [H, M]
    h1 = jnp.maximum(h1, 0.0).astype(jnp.bfloat16)
    p2 = jnp.dot(pw2t_ref[...], h1, preferred_element_type=jnp.float32)    # [P, M]
    # pc_b2 is NOT added here (hoisted to the finalize step).

    # Max-pool over the point axis via lane-aligned halving folds: columns are
    # laid out point-major, so max(cols[:w], cols[w:]) folds point n with
    # point n + w/Bt for the same batch element.
    bt = pcmax_ref.shape[1]
    m = p2
    width = p2.shape[1]
    while width > bt:
        width //= 2
        m = jnp.maximum(m[:, :width], m[:, width:])
    pcmax_ref[...] = jnp.maximum(pcmax_ref[...], m)                        # [P, Bt]

    # ---- last point tile: finish the head ----------------------------------
    @pl.when(j == nj - 1)
    def _finalize():
        pooled = pcmax_ref[...] + pb2_ref[...]        # hoisted pc_b2 bias
        out_ref[...] = (out_ref[...]
                        + jnp.dot(hwp_ref[...], pooled,
                                  preferred_element_type=jnp.float32)
                        ).astype(out_ref.dtype)


def network_forward(batch, params):
    states = batch['state']                      # [B, Din]
    pointclouds = batch.get('pointcloud', None)  # [B, N, 3]
    if pointclouds is None:
        # TODO(synk): state-only path (batch without 'pointcloud') of the
        # original module (different head input width) is not implemented.
        raise NotImplementedError("state-only forward path is not implemented")

    f32, bf16 = jnp.float32, jnp.bfloat16
    B, Din = states.shape
    _, N, _ = pointclouds.shape
    H = params['mlp_w2'].shape[1]
    P = params['pc_w2'].shape[1]
    OUT = params['head_w'].shape[1]
    OUT_pad = _round_up(OUT, 128)                # lane-dense head rows

    # ---- batch tile (batch sits on lanes, so tiles must be 128-aligned) ----
    if B >= 128:
        Bt = 128
    else:
        Bt = _round_up(B, 8)                     # single batch tile
    B_pad = _round_up(B, Bt)
    # TODO(synk): for B <= 128 there is a single block on the parallel axis, so
    # v7x's second TensorCore idles; splitting the point reduction across cores
    # is not implemented.

    # ---- point tile under a generation-aware VMEM budget --------------------
    vmem_cap = _vmem_capacity_bytes()
    vmem_limit = min((vmem_cap * 3) // 4, 100 * 1024 * 1024)
    budget = (vmem_limit * 3) // 5               # headroom for weights/out/DMA
    bytes_per_col = 48 + 6 * H + 6 * P           # coords(dbl-buf) + h1 + p2/folds
    n128 = _round_up(N, 128)
    Nt = 128                                     # power of two (fold-max needs it)
    while Nt < 2048 and Nt * 2 <= n128 and Bt * (Nt * 2) * bytes_per_col <= budget:
        Nt *= 2
    N_pad = _round_up(N, Nt)
    nb, nn = B_pad // Bt, N_pad // Nt
    M = Bt * Nt

    # ---- inputs (single packed pointcloud tensor; one wrapper transpose) ----
    states_t = jnp.pad(states.astype(f32), ((0, B_pad - B), (0, 0))).T     # [Din, B_pad]

    pc = pointclouds.astype(f32)
    if N_pad > N:
        # Edge-replicate points so the max-pool is unchanged.
        pc = jnp.concatenate(
            [pc, jnp.broadcast_to(pc[:, N - 1:N, :], (B, N_pad - N, 3))], axis=1)
    if B_pad > B:
        pc = jnp.pad(pc, ((0, B_pad - B), (0, 0), (0, 0)))
    pc4 = jnp.concatenate([pc, jnp.ones((B_pad, N_pad, 1), f32)], axis=-1)  # (x,y,z,1)
    coords = (pc4.reshape(nb, Bt, nn, Nt, 4)
                 .transpose(0, 2, 4, 3, 1)        # [nb, nn, 4, Nt, Bt]
                 .reshape(nb, nn, 4, M)
                 .astype(bf16))

    # ---- weights (transposed orientation; pointcloud branch in bf16) --------
    pw1t = jnp.concatenate([params['pc_w1'].T,
                            params['pc_b1'].reshape(1, H).T], axis=1).astype(bf16)  # [H, 4]
    pw2t = params['pc_w2'].T.astype(bf16)                                           # [P, H]
    pb2t = params['pc_b2'].reshape(1, P).T.astype(f32)                              # [P, 1]
    mw1t = params['mlp_w1'].T.astype(f32)                                           # [H, Din]
    mb1t = params['mlp_b1'].reshape(1, H).T.astype(f32)                             # [H, 1]
    mw2t = params['mlp_w2'].T.astype(f32)                                           # [H, H]
    mb2t = params['mlp_b2'].reshape(1, H).T.astype(f32)                             # [H, 1]
    hw = params['head_w'].astype(f32)
    hwst = jnp.pad(hw[:H].T, ((0, OUT_pad - OUT), (0, 0)))                          # [OUT_pad, H]
    hwpt = jnp.pad(hw[H:].T, ((0, OUT_pad - OUT), (0, 0)))                          # [OUT_pad, P]
    hbt = jnp.pad(params['head_b'].reshape(1, OUT).T.astype(f32),
                  ((0, OUT_pad - OUT), (0, 0)))                                      # [OUT_pad, 1]

    row_map = lambda i, j: (0, i)
    w_map = lambda i, j: (0, 0)
    in_specs = [
        pl.BlockSpec((Din, Bt), row_map),                              # states (T)
        pl.BlockSpec((None, None, 4, M), lambda i, j: (i, j, 0, 0)),   # packed coords
        pl.BlockSpec((H, 4), w_map),                                   # pc_w1.T|pc_b1
        pl.BlockSpec((P, H), w_map),                                   # pc_w2.T
        pl.BlockSpec((H, Din), w_map),                                 # mlp_w1.T
        pl.BlockSpec((H, 1), w_map),                                   # mlp_b1.T
        pl.BlockSpec((H, H), w_map),                                   # mlp_w2.T
        pl.BlockSpec((H, 1), w_map),                                   # mlp_b2.T
        pl.BlockSpec((OUT_pad, H), w_map),                             # head_w (state).T
        pl.BlockSpec((OUT_pad, P), w_map),                             # head_w (pc).T
        pl.BlockSpec((OUT_pad, 1), w_map),                             # head_b.T
        pl.BlockSpec((P, 1), w_map),                                   # pc_b2.T
    ]
    out_spec = pl.BlockSpec((OUT_pad, Bt), row_map)

    flops = (2 * B_pad * (Din * H + H * H + (H + P) * OUT_pad)
             + 2 * B_pad * N_pad * (4 * H + H * P))
    bytes_accessed = (4 * B_pad * Din + 2 * B_pad * N_pad * 4 + 4 * B_pad * OUT_pad
                      + 2 * (4 * H + P * H)
                      + 4 * (H * Din + H * H + 2 * H + (H + P + 1) * OUT_pad + P))

    out_t = pl.pallas_call(
        network_kernel,
        out_shape=jax.ShapeDtypeStruct((OUT_pad, B_pad), f32),
        grid_spec=pltpu.PrefetchScalarGridSpec(
            num_scalar_prefetch=0,
            grid=(nb, nn),
            in_specs=in_specs,
            out_specs=out_spec,
            scratch_shapes=[pltpu.VMEM((P, Bt), f32)],   # running max over points
        ),
        compiler_params=pltpu.CompilerParams(
            dimension_semantics=("parallel", "arbitrary"),
            vmem_limit_bytes=int(vmem_limit),
        ),
        cost_estimate=pl.CostEstimate(flops=flops, transcendentals=0,
                                      bytes_accessed=bytes_accessed),
    )(states_t, coords, pw1t, pw2t, mw1t, mb1t, mw2t, mb2t,
      hwst, hwpt, hbt, pb2t)

    return out_t[:OUT, :B].T


def init_params(key, in_channels, hidden, pc_feat, out_channels):
    ks = jax.random.split(key, 6)

    def lin(k, fan_in, fan_out):
        w = jax.random.normal(k, (fan_in, fan_out), jnp.float32) * (1.0 / jnp.sqrt(fan_in))
        b = jnp.zeros((1, fan_out), jnp.float32)
        return w, b

    mlp_w1, mlp_b1 = lin(ks[0], in_channels, hidden)
    mlp_w2, mlp_b2 = lin(ks[1], hidden, hidden)
    pc_w1, pc_b1 = lin(ks[2], 3, hidden)
    pc_w2, pc_b2 = lin(ks[3], hidden, pc_feat)
    head_w, head_b = lin(ks[4], hidden + pc_feat, out_channels)
    return dict(mlp_w1=mlp_w1, mlp_b1=mlp_b1, mlp_w2=mlp_w2, mlp_b2=mlp_b2,
                pc_w1=pc_w1, pc_b1=pc_b1, pc_w2=pc_w2, pc_b2=pc_b2,
                head_w=head_w, head_b=head_b)


def reference_forward(batch, params):
    # Pure-JAX f32 reference mirroring the PyTorch module semantics.
    hp = jax.lax.Precision.HIGHEST
    x = batch['state']
    h = jnp.maximum(jnp.dot(x, params['mlp_w1'], precision=hp) + params['mlp_b1'], 0.0)
    state_emb = jnp.dot(h, params['mlp_w2'], precision=hp) + params['mlp_b2']
    pc = batch['pointcloud']
    p = jnp.maximum(jnp.einsum('bnd,dh->bnh', pc, params['pc_w1'], precision=hp)
                    + params['pc_b1'], 0.0)
    p = jnp.einsum('bnh,hk->bnk', p, params['pc_w2'], precision=hp) + params['pc_b2']
    pc_emb = jnp.max(p, axis=1)
    emb = jnp.concatenate([state_emb, pc_emb], axis=-1)
    return jnp.dot(emb, params['head_w'], precision=hp) + params['head_b']


if __name__ == "__main__":
    B, Din, H, P, N_POINTS, OUT = 2, 8, 32, 32, 16, 4

    key = jax.random.PRNGKey(0)
    k_state, k_pc, k_params = jax.random.split(key, 3)

    batch = {
        'state': jax.random.normal(k_state, (B, Din), jnp.float32),
        'pointcloud': jax.random.normal(k_pc, (B, N_POINTS, 3), jnp.float32),
    }
    params = init_params(k_params, Din, H, P, OUT)

    out = network_forward(batch, params)
    out = jax.block_until_ready(out)

    ref = jax.block_until_ready(reference_forward(batch, params))
    assert out.shape == (B, OUT)
    # Pointcloud branch uses bf16 MXU operands (f32 accumulation), so compare
    # against the f32 reference with a bf16-appropriate tolerance.
    assert jnp.allclose(out, ref, rtol=5e-2, atol=5e-2), "mismatch vs JAX reference"

    print("KERNEL_OK")
</pallas_src>

<mosaic_0001>
module attributes {stable_mosaic.version = 11 : i64} {
  func.func @network_kernel(%arg0: i32, %arg1: i32, %arg2: memref<8x8xf32, #tpu.memory_space<vmem>>, %arg3: memref<1x1x4x1024xbf16, #tpu.memory_space<vmem>>, %arg4: memref<32x4xbf16, #tpu.memory_space<vmem>>, %arg5: memref<32x32xbf16, #tpu.memory_space<vmem>>, %arg6: memref<32x8xf32, #tpu.memory_space<vmem>>, %arg7: memref<32x1xf32, #tpu.memory_space<vmem>>, %arg8: memref<32x32xf32, #tpu.memory_space<vmem>>, %arg9: memref<32x1xf32, #tpu.memory_space<vmem>>, %arg10: memref<128x32xf32, #tpu.memory_space<vmem>>, %arg11: memref<128x32xf32, #tpu.memory_space<vmem>>, %arg12: memref<128x1xf32, #tpu.memory_space<vmem>>, %arg13: memref<32x1xf32, #tpu.memory_space<vmem>>, %arg14: memref<128x8xf32, #tpu.memory_space<vmem>>, %arg15: memref<32x8xf32, #tpu.memory_space<vmem>>) attributes {dimension_semantics = [#tpu.dimension_semantics<parallel>, #tpu.dimension_semantics<arbitrary>], iteration_bounds = array<i64: 1, 1>, scalar_prefetch = 0 : i64, scratch_operands = 1 : i64, tpu.core_type = #tpu.core_type<tc>, window_params = [{transform_indices = @transform_0, window_bounds = array<i64: 8, 8>}, {transform_indices = @transform_1, window_bounds = array<i64: 1, 1, 4, 1024>}, {pipeline_mode = #tpu.pipeline_mode<synchronous>, transform_indices = @transform_2, window_bounds = array<i64: 32, 4>}, {pipeline_mode = #tpu.pipeline_mode<synchronous>, transform_indices = @transform_3, window_bounds = array<i64: 32, 32>}, {pipeline_mode = #tpu.pipeline_mode<synchronous>, transform_indices = @transform_4, window_bounds = array<i64: 32, 8>}, {pipeline_mode = #tpu.pipeline_mode<synchronous>, transform_indices = @transform_5, window_bounds = array<i64: 32, 1>}, {pipeline_mode = #tpu.pipeline_mode<synchronous>, transform_indices = @transform_6, window_bounds = array<i64: 32, 32>}, {pipeline_mode = #tpu.pipeline_mode<synchronous>, transform_indices = @transform_7, window_bounds = array<i64: 32, 1>}, {pipeline_mode = #tpu.pipeline_mode<synchronous>, transform_indices = @transform_8, window_bounds = array<i64: 128, 32>}, {pipeline_mode = #tpu.pipeline_mode<synchronous>, transform_indices = @transform_9, window_bounds = array<i64: 128, 32>}, {pipeline_mode = #tpu.pipeline_mode<synchronous>, transform_indices = @transform_10, window_bounds = array<i64: 128, 1>}, {pipeline_mode = #tpu.pipeline_mode<synchronous>, transform_indices = @transform_11, window_bounds = array<i64: 32, 1>}, {transform_indices = @transform_12, window_bounds = array<i64: 128, 8>}]} {
    %c0_i32 = arith.constant 0 : i32
    %0 = arith.cmpi eq, %arg1, %c0_i32 : i32
    %1 = arith.extui %0 : i1 to i32
    %c0_i32_0 = arith.constant 0 : i32
    %2 = arith.cmpi ne, %1, %c0_i32_0 : i32
    scf.if %2 {
      %c0_16 = arith.constant 0 : index
      %c0_17 = arith.constant 0 : index
      %39 = vector.load %arg2[%c0_16, %c0_17] : memref<8x8xf32, #tpu.memory_space<vmem>>, vector<8x8xf32>
      %c0_18 = arith.constant 0 : index
      %c0_19 = arith.constant 0 : index
      %40 = vector.load %arg6[%c0_18, %c0_19] : memref<32x8xf32, #tpu.memory_space<vmem>>, vector<32x8xf32>
      %cst_20 = arith.constant dense<0.000000e+00> : vector<32x8xf32>
      %41 = tpu.matmul %40, %39, %cst_20 {dimension_numbers = #tpu.dot_dimension_numbers<[1], [0], [0], [1], [0, 0, 1, 1], [], []>} : vector<32x8xf32>, vector<8x8xf32>, vector<32x8xf32> -> vector<32x8xf32>
      %c0_21 = arith.constant 0 : index
      %c0_22 = arith.constant 0 : index
      %42 = vector.load %arg7[%c0_21, %c0_22] : memref<32x1xf32, #tpu.memory_space<vmem>>, vector<32x1xf32>
      %43 = vector.broadcast %42 : vector<32x1xf32> to vector<32x8xf32>
      %44 = arith.addf %41, %43 : vector<32x8xf32>
      %cst_23 = arith.constant 0.000000e+00 : f32
      %45 = vector.broadcast %cst_23 : f32 to vector<32x8xf32>
      %46 = arith.maximumf %44, %45 : vector<32x8xf32>
      %c0_24 = arith.constant 0 : index
      %c0_25 = arith.constant 0 : index
      %47 = vector.load %arg8[%c0_24, %c0_25] : memref<32x32xf32, #tpu.memory_space<vmem>>, vector<32x32xf32>
      %cst_26 = arith.constant dense<0.000000e+00> : vector<32x8xf32>
      %48 = tpu.matmul %47, %46, %cst_26 {dimension_numbers = #tpu.dot_dimension_numbers<[1], [0], [0], [1], [0, 0, 1, 1], [], []>} : vector<32x32xf32>, vector<32x8xf32>, vector<32x8xf32> -> vector<32x8xf32>
      %c0_27 = arith.constant 0 : index
      %c0_28 = arith.constant 0 : index
      %49 = vector.load %arg9[%c0_27, %c0_28] : memref<32x1xf32, #tpu.memory_space<vmem>>, vector<32x1xf32>
      %50 = vector.broadcast %49 : vector<32x1xf32> to vector<32x8xf32>
      %51 = arith.addf %48, %50 : vector<32x8xf32>
      %c0_29 = arith.constant 0 : index
      %c0_30 = arith.constant 0 : index
      %52 = vector.load %arg10[%c0_29, %c0_30] : memref<128x32xf32, #tpu.memory_space<vmem>>, vector<128x32xf32>
      %cst_31 = arith.constant dense<0.000000e+00> : vector<128x8xf32>
      %53 = tpu.matmul %52, %51, %cst_31 {dimension_numbers = #tpu.dot_dimension_numbers<[1], [0], [0], [1], [0, 0, 1, 1], [], []>} : vector<128x32xf32>, vector<32x8xf32>, vector<128x8xf32> -> vector<128x8xf32>
      %c0_32 = arith.constant 0 : index
      %c0_33 = arith.constant 0 : index
      %54 = vector.load %arg12[%c0_32, %c0_33] : memref<128x1xf32, #tpu.memory_space<vmem>>, vector<128x1xf32>
      %55 = vector.broadcast %54 : vector<128x1xf32> to vector<128x8xf32>
      %56 = arith.addf %53, %55 : vector<128x8xf32>
      %c0_34 = arith.constant 0 : index
      %c0_35 = arith.constant 0 : index
      %57 = vector.load %arg14[%c0_34, %c0_35] : memref<128x8xf32, #tpu.memory_space<vmem>>, vector<128x8xf32>
      tpu.vector_store %arg14[%c0_34, %c0_35], %56 {strides = array<i32>} : memref<128x8xf32, #tpu.memory_space<vmem>>, vector<128x8xf32>,
      %cst_36 = arith.constant 0xFF800000 : f32
      %58 = vector.broadcast %cst_36 : f32 to vector<32x8xf32>
      %c0_37 = arith.constant 0 : index
      %c0_38 = arith.constant 0 : index
      %59 = vector.load %arg15[%c0_37, %c0_38] : memref<32x8xf32, #tpu.memory_space<vmem>>, vector<32x8xf32>
      tpu.vector_store %arg15[%c0_37, %c0_38], %58 {strides = array<i32>} : memref<32x8xf32, #tpu.memory_space<vmem>>, vector<32x8xf32>,
    } else {
    }
    %c0 = arith.constant 0 : index
    %c0_1 = arith.constant 0 : index
    %c0_2 = arith.constant 0 : index
    %c0_3 = arith.constant 0 : index
    %3 = vector.load %arg3[%c0, %c0_1, %c0_2, %c0_3] : memref<1x1x4x1024xbf16, #tpu.memory_space<vmem>>, vector<1x1x4x1024xbf16>
    %4 = vector.shape_cast %3 : vector<1x1x4x1024xbf16> to vector<4x1024xbf16>
    %c0_4 = arith.constant 0 : index
    %c0_5 = arith.constant 0 : index
    %5 = vector.load %arg4[%c0_4, %c0_5] : memref<32x4xbf16, #tpu.memory_space<vmem>>, vector<32x4xbf16>
    %cst = arith.constant dense<0.000000e+00> : vector<32x1024xf32>
    %6 = tpu.matmul %5, %4, %cst {dimension_numbers = #tpu.dot_dimension_numbers<[1], [0], [0], [1], [0, 0, 1, 1], [], []>} : vector<32x4xbf16>, vector<4x1024xbf16>, vector<32x1024xf32> -> vector<32x1024xf32>
    %cst_6 = arith.constant 0.000000e+00 : f32
    %7 = vector.broadcast %cst_6 : f32 to vector<32x1024xf32>
    %8 = arith.maximumf %6, %7 : vector<32x1024xf32>
    %9 = arith.truncf %8 : vector<32x1024xf32> to vector<32x1024xbf16>
    %c0_7 = arith.constant 0 : index
    %c0_8 = arith.constant 0 : index
    %10 = vector.load %arg5[%c0_7, %c0_8] : memref<32x32xbf16, #tpu.memory_space<vmem>>, vector<32x32xbf16>
    %cst_9 = arith.constant dense<0.000000e+00> : vector<32x1024xf32>
    %11 = tpu.matmul %10, %9, %cst_9 {dimension_numbers = #tpu.dot_dimension_numbers<[1], [0], [0], [1], [0, 0, 1, 1], [], []>} : vector<32x32xbf16>, vector<32x1024xbf16>, vector<32x1024xf32> -> vector<32x1024xf32>
    %12 = vector.extract_strided_slice %11 {offsets = [0, 0], sizes = [32, 512], strides = [1, 1]} : vector<32x1024xf32> to vector<32x512xf32>
    %13 = vector.extract_strided_slice %11 {offsets = [0, 512], sizes = [32, 512], strides = [1, 1]} : vector<32x1024xf32> to vector<32x512xf32>
    %14 = arith.maximumf %12, %13 : vector<32x512xf32>
    %15 = vector.extract_strided_slice %14 {offsets = [0, 0], sizes = [32, 256], strides = [1, 1]} : vector<32x512xf32> to vector<32x256xf32>
    %16 = vector.extract_strided_slice %14 {offsets = [0, 256], sizes = [32, 256], strides = [1, 1]} : vector<32x512xf32> to vector<32x256xf32>
    %17 = arith.maximumf %15, %16 : vector<32x256xf32>
    %18 = vector.extract_strided_slice %17 {offsets = [0, 0], sizes = [32, 128], strides = [1, 1]} : vector<32x256xf32> to vector<32x128xf32>
    %19 = vector.extract_strided_slice %17 {offsets = [0, 128], sizes = [32, 128], strides = [1, 1]} : vector<32x256xf32> to vector<32x128xf32>
    %20 = arith.maximumf %18, %19 : vector<32x128xf32>
    %21 = vector.extract_strided_slice %20 {offsets = [0, 0], sizes = [32, 64], strides = [1, 1]} : vector<32x128xf32> to vector<32x64xf32>
    %22 = vector.extract_strided_slice %20 {offsets = [0, 64], sizes = [32, 64], strides = [1, 1]} : vector<32x128xf32> to vector<32x64xf32>
    %23 = arith.maximumf %21, %22 : vector<32x64xf32>
    %24 = vector.extract_strided_slice %23 {offsets = [0, 0], sizes = [32, 32], strides = [1, 1]} : vector<32x64xf32> to vector<32x32xf32>
    %25 = vector.extract_strided_slice %23 {offsets = [0, 32], sizes = [32, 32], strides = [1, 1]} : vector<32x64xf32> to vector<32x32xf32>
    %26 = arith.maximumf %24, %25 : vector<32x32xf32>
    %27 = vector.extract_strided_slice %26 {offsets = [0, 0], sizes = [32, 16], strides = [1, 1]} : vector<32x32xf32> to vector<32x16xf32>
    %28 = vector.extract_strided_slice %26 {offsets = [0, 16], sizes = [32, 16], strides = [1, 1]} : vector<32x32xf32> to vector<32x16xf32>
    %29 = arith.maximumf %27, %28 : vector<32x16xf32>
    %30 = vector.extract_strided_slice %29 {offsets = [0, 0], sizes = [32, 8], strides = [1, 1]} : vector<32x16xf32> to vector<32x8xf32>
    %31 = vector.extract_strided_slice %29 {offsets = [0, 8], sizes = [32, 8], strides = [1, 1]} : vector<32x16xf32> to vector<32x8xf32>
    %32 = arith.maximumf %30, %31 : vector<32x8xf32>
    %c0_10 = arith.constant 0 : index
    %c0_11 = arith.constant 0 : index
    %33 = vector.load %arg15[%c0_10, %c0_11] : memref<32x8xf32, #tpu.memory_space<vmem>>, vector<32x8xf32>
    %34 = arith.maximumf %33, %32 : vector<32x8xf32>
    %c0_12 = arith.constant 0 : index
    %c0_13 = arith.constant 0 : index
    %35 = vector.load %arg15[%c0_12, %c0_13] : memref<32x8xf32, #tpu.memory_space<vmem>>, vector<32x8xf32>
    tpu.vector_store %arg15[%c0_12, %c0_13], %34 {strides = array<i32>} : memref<32x8xf32, #tpu.memory_space<vmem>>, vector<32x8xf32>,
    %c0_i32_14 = arith.constant 0 : i32
    %36 = arith.cmpi eq, %arg1, %c0_i32_14 : i32
    %37 = arith.extui %36 : i1 to i32
    %c0_i32_15 = arith.constant 0 : i32
    %38 = arith.cmpi ne, %37, %c0_i32_15 : i32
    scf.if %38 {
      %c0_16 = arith.constant 0 : index
      %c0_17 = arith.constant 0 : index
      %39 = vector.load %arg15[%c0_16, %c0_17] : memref<32x8xf32, #tpu.memory_space<vmem>>, vector<32x8xf32>
      %c0_18 = arith.constant 0 : index
      %c0_19 = arith.constant 0 : index
      %40 = vector.load %arg13[%c0_18, %c0_19] : memref<32x1xf32, #tpu.memory_space<vmem>>, vector<32x1xf32>
      %41 = vector.broadcast %40 : vector<32x1xf32> to vector<32x8xf32>
      %42 = arith.addf %39, %41 : vector<32x8xf32>
      %c0_20 = arith.constant 0 : index
      %c0_21 = arith.constant 0 : index
      %43 = vector.load %arg14[%c0_20, %c0_21] : memref<128x8xf32, #tpu.memory_space<vmem>>, vector<128x8xf32>
      %c0_22 = arith.constant 0 : index
      %c0_23 = arith.constant 0 : index
      %44 = vector.load %arg11[%c0_22, %c0_23] : memref<128x32xf32, #tpu.memory_space<vmem>>, vector<128x32xf32>
      %cst_24 = arith.constant dense<0.000000e+00> : vector<128x8xf32>
      %45 = tpu.matmul %44, %42, %cst_24 {dimension_numbers = #tpu.dot_dimension_numbers<[1], [0], [0], [1], [0, 0, 1, 1], [], []>} : vector<128x32xf32>, vector<32x8xf32>, vector<128x8xf32> -> vector<128x8xf32>
      %46 = arith.addf %43, %45 : vector<128x8xf32>
      %c0_25 = arith.constant 0 : index
      %c0_26 = arith.constant 0 : index
      %47 = vector.load %arg14[%c0_25, %c0_26] : memref<128x8xf32, #tpu.memory_space<vmem>>, vector<128x8xf32>
      tpu.vector_store %arg14[%c0_25, %c0_26], %46 {strides = array<i32>} : memref<128x8xf32, #tpu.memory_space<vmem>>, vector<128x8xf32>,
    } else {
    }
    return
  }
  func.func @transform_0(%arg0: i32, %arg1: i32) -> (i32, i32) {
    %c0_i32 = arith.constant 0 : i32
    %c0_i32_0 = arith.constant 0 : i32
    return %c0_i32, %arg0 : i32, i32
  }
  func.func @transform_1(%arg0: i32, %arg1: i32) -> (i32, i32, i32, i32) {
    %c0_i32 = arith.constant 0 : i32
    %c0_i32_0 = arith.constant 0 : i32
    %c0_i32_1 = arith.constant 0 : i32
    return %arg0, %arg1, %c0_i32, %c0_i32_0 : i32, i32, i32, i32
  }
  func.func @transform_2(%arg0: i32, %arg1: i32) -> (i32, i32) {
    %c0_i32 = arith.constant 0 : i32
    %c0_i32_0 = arith.constant 0 : i32
    %c0_i32_1 = arith.constant 0 : i32
    return %c0_i32, %c0_i32_0 : i32, i32
  }
  func.func @transform_3(%arg0: i32, %arg1: i32) -> (i32, i32) {
    %c0_i32 = arith.constant 0 : i32
    %c0_i32_0 = arith.constant 0 : i32
    %c0_i32_1 = arith.constant 0 : i32
    return %c0_i32, %c0_i32_0 : i32, i32
  }
  func.func @transform_4(%arg0: i32, %arg1: i32) -> (i32, i32) {
    %c0_i32 = arith.constant 0 : i32
    %c0_i32_0 = arith.constant 0 : i32
    %c0_i32_1 = arith.constant 0 : i32
    return %c0_i32, %c0_i32_0 : i32, i32
  }
  func.func @transform_5(%arg0: i32, %arg1: i32) -> (i32, i32) {
    %c0_i32 = arith.constant 0 : i32
    %c0_i32_0 = arith.constant 0 : i32
    %c0_i32_1 = arith.constant 0 : i32
    return %c0_i32, %c0_i32_0 : i32, i32
  }
  func.func @transform_6(%arg0: i32, %arg1: i32) -> (i32, i32) {
    %c0_i32 = arith.constant 0 : i32
    %c0_i32_0 = arith.constant 0 : i32
    %c0_i32_1 = arith.constant 0 : i32
    return %c0_i32, %c0_i32_0 : i32, i32
  }
  func.func @transform_7(%arg0: i32, %arg1: i32) -> (i32, i32) {
    %c0_i32 = arith.constant 0 : i32
    %c0_i32_0 = arith.constant 0 : i32
    %c0_i32_1 = arith.constant 0 : i32
    return %c0_i32, %c0_i32_0 : i32, i32
  }
  func.func @transform_8(%arg0: i32, %arg1: i32) -> (i32, i32) {
    %c0_i32 = arith.constant 0 : i32
    %c0_i32_0 = arith.constant 0 : i32
    %c0_i32_1 = arith.constant 0 : i32
    return %c0_i32, %c0_i32_0 : i32, i32
  }
  func.func @transform_9(%arg0: i32, %arg1: i32) -> (i32, i32) {
    %c0_i32 = arith.constant 0 : i32
    %c0_i32_0 = arith.constant 0 : i32
    %c0_i32_1 = arith.constant 0 : i32
    return %c0_i32, %c0_i32_0 : i32, i32
  }
  func.func @transform_10(%arg0: i32, %arg1: i32) -> (i32, i32) {
    %c0_i32 = arith.constant 0 : i32
    %c0_i32_0 = arith.constant 0 : i32
    %c0_i32_1 = arith.constant 0 : i32
    return %c0_i32, %c0_i32_0 : i32, i32
  }
  func.func @transform_11(%arg0: i32, %arg1: i32) -> (i32, i32) {
    %c0_i32 = arith.constant 0 : i32
    %c0_i32_0 = arith.constant 0 : i32
    %c0_i32_1 = arith.constant 0 : i32
    return %c0_i32, %c0_i32_0 : i32, i32
  }
  func.func @transform_12(%arg0: i32, %arg1: i32) -> (i32, i32) {
    %c0_i32 = arith.constant 0 : i32
    %c0_i32_0 = arith.constant 0 : i32
    return %c0_i32, %arg0 : i32, i32
  }
}

</mosaic_0001>

<llo_original>
// kernel: tpu_custom_call.1
$region0: #{tpu_custom_call.1}
  #allocation0 [shape = 'u32[]', space=smem, size = 0x4, offset = 0x4, fixed_abs, tag = 'smem constant byte address 0x4 - core index']
  #allocation1 [shape = 'u32[72,128]{1,0:T(1,128)}', space=vmem, size = 0x9000, scoped, tag = 'internal scratch']
  #allocation2 [shape = 'f32[32,8]{1,0:T(8,128)}', space=vmem, size = 0x4000, scoped, tag = 'scratch operand']
  %s0 = inlined_call_operand.vmem [shape: f32[8,8], index: 0, kind: input, shape index: {}]
  %s1 = inlined_call_operand.vmem [shape: bf16[1,1,4,1024], index: 1, kind: input, shape index: {}]
  %s2 = inlined_call_operand.vmem [shape: bf16[32,4], index: 2, kind: input, shape index: {}]
  %s3 = inlined_call_operand.vmem [shape: bf16[32,32], index: 3, kind: input, shape index: {}]
  %s4 = inlined_call_operand.vmem [shape: f32[32,8], index: 4, kind: input, shape index: {}]
  %s5 = inlined_call_operand.vmem [shape: f32[32,1], index: 5, kind: input, shape index: {}]
  %s6 = inlined_call_operand.vmem [shape: f32[32,32], index: 6, kind: input, shape index: {}]
  %s7 = inlined_call_operand.vmem [shape: f32[32,1], index: 7, kind: input, shape index: {}]
  %s8 = inlined_call_operand.vmem [shape: f32[128,32], index: 8, kind: input, shape index: {}]
  %s9 = inlined_call_operand.vmem [shape: f32[128,32], index: 9, kind: input, shape index: {}]
  %s10 = inlined_call_operand.vmem [shape: f32[128,1], index: 10, kind: input, shape index: {}]
  %s11 = inlined_call_operand.vmem [shape: f32[32,1], index: 11, kind: input, shape index: {}]
  %s12 = inlined_call_operand.vmem [shape: f32[128,8], index: 12, kind: output, shape index: {}]
  %s13 = sld [smem:[#allocation0]]
  $region66: #{tpu_custom_call.1} parent=0
    _
  %s15 = ssub.s32 1, %s13
  %s16 = scalar_select 0, %s15, %s13
  // Predicated region
  $region2: #{tpu_custom_call.1} parent=0 // pred_check
    _
  $region3: #{tpu_custom_call.1} parent=0 // pred_check_branch
    %18 = sbr.rel (0) target = $region5
  $region4: #{tpu_custom_call.1} parent=0 // pred_region
    _
  $region5: #{tpu_custom_call.1} parent=0 // pred_fallthru
    _
  // Predicated region
  $region6: #{tpu_custom_call.1} parent=0 // pred_check
    _
  $region7: #{tpu_custom_call.1} parent=0 // pred_check_branch
    %20 = sbr.rel (0) target = $region9
  $region8: #{tpu_custom_call.1} parent=0 // pred_region
    _
  $region9: #{tpu_custom_call.1} parent=0 // pred_fallthru
    _
  // Predicated region
  $region10: #{tpu_custom_call.1} parent=0 // pred_check
    _
  $region11: #{tpu_custom_call.1} parent=0 // pred_check_branch
    %22 = sbr.rel (0) target = $region13
  $region12: #{tpu_custom_call.1} parent=0 // pred_region
    _
  $region13: #{tpu_custom_call.1} parent=0 // pred_fallthru
    _
  // Predicated region
  $region14: #{tpu_custom_call.1} parent=0 // pred_check
    _
  $region15: #{tpu_custom_call.1} parent=0 // pred_check_branch
    %24 = sbr.rel (0) target = $region17
  $region16: #{tpu_custom_call.1} parent=0 // pred_region
    _
  $region17: #{tpu_custom_call.1} parent=0 // pred_fallthru
    _
  // Predicated region
  $region18: #{tpu_custom_call.1} parent=0 // pred_check
    _
  $region19: #{tpu_custom_call.1} parent=0 // pred_check_branch
    %26 = sbr.rel (0) target = $region21
  $region20: #{tpu_custom_call.1} parent=0 // pred_region
    _
  $region21: #{tpu_custom_call.1} parent=0 // pred_fallthru
    _
  // Predicated region
  $region22: #{tpu_custom_call.1} parent=0 // pred_check
    _
  $region23: #{tpu_custom_call.1} parent=0 // pred_check_branch
    %28 = sbr.rel (0) target = $region25
  $region24: #{tpu_custom_call.1} parent=0 // pred_region
    _
  $region25: #{tpu_custom_call.1} parent=0 // pred_fallthru
    _
  // Predicated region
  $region26: #{tpu_custom_call.1} parent=0 // pred_check
    _
  $region27: #{tpu_custom_call.1} parent=0 // pred_check_branch
    %30 = sbr.rel (0) target = $region29
  $region28: #{tpu_custom_call.1} parent=0 // pred_region
    _
  $region29: #{tpu_custom_call.1} parent=0 // pred_fallthru
    _
  // Predicated region
  $region30: #{tpu_custom_call.1} parent=0 // pred_check
    _
  $region31: #{tpu_custom_call.1} parent=0 // pred_check_branch
    %32 = sbr.rel (0) target = $region33
  $region32: #{tpu_custom_call.1} parent=0 // pred_region
    _
  $region33: #{tpu_custom_call.1} parent=0 // pred_fallthru
    _
  // Predicated region
  $region34: #{tpu_custom_call.1} parent=0 // pred_check
    _
  $region35: #{tpu_custom_call.1} parent=0 // pred_check_branch
    %34 = sbr.rel (0) target = $region37
  $region36: #{tpu_custom_call.1} parent=0 // pred_region
    _
  $region37: #{tpu_custom_call.1} parent=0 // pred_fallthru
    _
  // Predicated region
  $region38: #{tpu_custom_call.1} parent=0 // pred_check
    _
  $region39: #{tpu_custom_call.1} parent=0 // pred_check_branch
    %36 = sbr.rel (0) target = $region41
  $region40: #{tpu_custom_call.1} parent=0 // pred_region
    _
  $region41: #{tpu_custom_call.1} parent=0 // pred_fallthru
    _
  // Predicated region
  $region42: #{tpu_custom_call.1} parent=0 // pred_check
    _
  $region43: #{tpu_custom_call.1} parent=0 // pred_check_branch
    %38 = sbr.rel (0) target = $region45
  $region44: #{tpu_custom_call.1} parent=0 // pred_region
    _
  $region45: #{tpu_custom_call.1} parent=0 // pred_fallthru
    _
  // Predicated region
  $region46: #{tpu_custom_call.1} parent=0 // pred_check
    _
  $region47: #{tpu_custom_call.1} parent=0 // pred_check_branch
    %40 = sbr.rel (0) target = $region49
  $region48: #{tpu_custom_call.1} parent=0 // pred_region
    _
  $region49: #{tpu_custom_call.1} parent=0 // pred_fallthru
    _
  %p42 = scmp.eq.s32.totalorder 0, 0
  // Predicated region
  $region50: #{tpu_custom_call.1} parent=0 // pred_check
    %p43 = pneg %p42
  $region51: #{tpu_custom_call.1} parent=0 // pred_check_branch
    %45 = sbr.rel (%p43) target = $region53
  $region52: #{tpu_custom_call.1} parent=0 // pred_region
    %v46 = vld [vmem:[%s0] sm:$0xff]
    %v47 = vld [vmem:[%s4] sm:$0xff]
    %v48 = vld [vmem:[%s4 + $0x8] sm:$0xff]
    %v49 = vld [vmem:[%s4 + $0x10] sm:$0xff]
    %v50 = vld [vmem:[%s4 + $0x18] sm:$0xff]
    %v51 = vld [vmem:[%s5] sm:$0xff]
    %v52 = vld [vmem:[%s5 + $0x8] sm:$0xff]
    %v53 = vld [vmem:[%s5 + $0x10] sm:$0xff]
    %v54 = vld [vmem:[%s5 + $0x18] sm:$0xff]
    %56 = vset.pattern.permute.xlu0 0
    %57 = vperm.xlu0 %56, %v51
    %v58 = vpop.permute.xlu0 %57
    %61 = vset.pattern.permute.xlu0 0
    %62 = vperm.xlu0 %61, %v52
    %v63 = vpop.permute.xlu0 %62
    %66 = vset.pattern.permute.xlu0 0
    %67 = vperm.xlu0 %66, %v53
    %v68 = vpop.permute.xlu0 %67
    %71 = vset.pattern.permute.xlu0 0
    %72 = vperm.xlu0 %71, %v54
    %v73 = vpop.permute.xlu0 %72
    %vm75 = vcmask 64512
    %v77 = vsel %vm75, %v47, 0
    %v80 = vsel %vm75, %v48, 0
    %v83 = vsel %vm75, %v49, 0
    %v86 = vsel %vm75, %v50, 0
    %88 = vmatpush.msra.mxu0 0.0
    %89 = vmatpush.msra.mxu0 0.0
    %90 = vmatpush.msra.mxu0 0.0
    %91 = vmatpush.msra.mxu0 0.0
    %92 = vmatpush.msra.mxu0 0.0
    %93 = vmatpush.msra.mxu0 0.0
    %94 = vmatpush.msra.mxu0 0.0
    %95 = vmatpush.msra.mxu0 0.0
    %96 = vmatpush.msra.mxu0 0.0
    %97 = vmatpush.msra.mxu0 0.0
    %98 = vmatpush.msra.mxu0 0.0
    %99 = vmatpush.msra.mxu0 0.0
    %100 = vmatpush.msra.mxu0 0.0
    %101 = vmatpush.msra.mxu0 0.0
    %102 = vmatpush.msra.mxu0 0.0
    %103 = vmatpush.msra.mxu0 %v46
    %104 = vmatmul.f32.gmra.mxu0 %v77
    %v105 = vpop.f32.mrf.mxu0
    %v106 = vadd.f32 %v58, %v105
    %107 = vmatmul.f32.gmra.mxu0 %v80
    %v108 = vpop.f32.mrf.mxu0
    %v109 = vadd.f32 %v63, %v108
    %110 = vmatmul.f32.gmra.mxu0 %v83
    %v111 = vpop.f32.mrf.mxu0
    %v112 = vadd.f32 %v68, %v111
    %113 = vmatmul.f32.gmra.mxu0 %v86
    %v114 = vpop.f32.mrf.mxu0
    %v115 = vadd.f32 %v73, %v114
    %116 = vdwg.mxu0
    %v117 = vmax.f32 %v106, 0.0
    %v118 = vmax.f32 %v109, 0.0
    %v119 = vmax.f32 %v112, 0.0
    %v120 = vmax.f32 %v115, 0.0
    %v121 = vld [vmem:[%s6] sm:$0xff]
    %v122 = vld [vmem:[%s6 + $0x8] sm:$0xff]
    %v123 = vld [vmem:[%s6 + $0x10] sm:$0xff]
    %v124 = vld [vmem:[%s6 + $0x18] sm:$0xff]
    %v125 = vld [vmem:[%s7] sm:$0xff]
    %v126 = vld [vmem:[%s7 + $0x8] sm:$0xff]
    %v127 = vld [vmem:[%s7 + $0x10] sm:$0xff]
    %v128 = vld [vmem:[%s7 + $0x18] sm:$0xff]
    %130 = vset.pattern.permute.xlu0 0
    %131 = vperm.xlu0 %130, %v125
    %v132 = vpop.permute.xlu0 %131
    %135 = vset.pattern.permute.xlu0 0
    %136 = vperm.xlu0 %135, %v126
    %v137 = vpop.permute.xlu0 %136
    %140 = vset.pattern.permute.xlu0 0
    %141 = vperm.xlu0 %140, %v127
    %v142 = vpop.permute.xlu0 %141
    %145 = vset.pattern.permute.xlu0 0
    %146 = vperm.xlu0 %145, %v128
    %v147 = vpop.permute.xlu0 %146
    %vm149 = vcmask 261120
    %v151 = vsel %vm149, %v121, 0
    %v154 = vsel %vm149, %v122, 0
    %v157 = vsel %vm149, %v123, 0
    %v160 = vsel %vm149, %v124, 0
    %162 = vmatpush.msra.mxu0 0.0
    %163 = vmatpush.msra.mxu0 0.0
    %164 = vmatpush.msra.mxu0 0.0
    %165 = vmatpush.msra.mxu0 0.0
    %166 = vmatpush.msra.mxu0 0.0
    %167 = vmatpush.msra.mxu0 0.0
    %168 = vmatpush.msra.mxu0 0.0
    %169 = vmatpush.msra.mxu0 0.0
    %170 = vmatpush.msra.mxu0 0.0
    %171 = vmatpush.msra.mxu0 0.0
    %172 = vmatpush.msra.mxu0 0.0
    %173 = vmatpush.msra.mxu0 0.0
    %174 = vmatpush.msra.mxu0 %v120
    %175 = vmatpush.msra.mxu0 %v119
    %176 = vmatpush.msra.mxu0 %v118
    %177 = vmatpush.msra.mxu0 %v117
    %178 = vmatmul.f32.gmra.mxu0 %v151
    %v179 = vpop.f32.mrf.mxu0
    %v180 = vadd.f32 %v132, %v179
    %181 = vmatmul.f32.gmra.mxu0 %v154
    %v182 = vpop.f32.mrf.mxu0
    %v183 = vadd.f32 %v137, %v182
    %184 = vmatmul.f32.gmra.mxu0 %v157
    %v185 = vpop.f32.mrf.mxu0
    %v186 = vadd.f32 %v142, %v185
    %187 = vmatmul.f32.gmra.mxu0 %v160
    %v188 = vpop.f32.mrf.mxu0
    %v189 = vadd.f32 %v147, %v188
    %190 = vdwg.mxu0
    %v191 = vld [vmem:[%s8] sm:$0xff]
    %v192 = vld [vmem:[%s8 + $0x8] sm:$0xff]
    %v193 = vld [vmem:[%s8 + $0x10] sm:$0xff]
    %v194 = vld [vmem:[%s8 + $0x18] sm:$0xff]
    %v195 = vld [vmem:[%s8 + $0x20] sm:$0xff]
    %v196 = vld [vmem:[%s8 + $0x28] sm:$0xff]
    %v197 = vld [vmem:[%s8 + $0x30] sm:$0xff]
    %v198 = vld [vmem:[%s8 + $0x38] sm:$0xff]
    %v199 = vld [vmem:[%s8 + $0x40] sm:$0xff]
    %v200 = vld [vmem:[%s8 + $0x48] sm:$0xff]
    %v201 = vld [vmem:[%s8 + $0x50] sm:$0xff]
    %v202 = vld [vmem:[%s8 + $0x58] sm:$0xff]
    %v203 = vld [vmem:[%s8 + $0x60] sm:$0xff]
    %v204 = vld [vmem:[%s8 + $0x68] sm:$0xff]
    %v205 = vld [vmem:[%s8 + $0x70] sm:$0xff]
    %v206 = vld [vmem:[%s8 + $0x78] sm:$0xff]
    %v207 = vld [vmem:[%s10] sm:$0xff]
    %v208 = vld [vmem:[%s10 + $0x8] sm:$0xff]
    %v209 = vld [vmem:[%s10 + $0x10] sm:$0xff]
    %v210 = vld [vmem:[%s10 + $0x18] sm:$0xff]
    %v211 = vld [vmem:[%s10 + $0x20] sm:$0xff]
    %v212 = vld [vmem:[%s10 + $0x28] sm:$0xff]
    %v213 = vld [vmem:[%s10 + $0x30] sm:$0xff]
    %v214 = vld [vmem:[%s10 + $0x38] sm:$0xff]
    %v215 = vld [vmem:[%s10 + $0x40] sm:$0xff]
    %v216 = vld [vmem:[%s10 + $0x48] sm:$0xff]
    %v217 = vld [vmem:[%s10 + $0x50] sm:$0xff]
    %v218 = vld [vmem:[%s10 + $0x58] sm:$0xff]
    %v219 = vld [vmem:[%s10 + $0x60] sm:$0xff]
    %v220 = vld [vmem:[%s10 + $0x68] sm:$0xff]
    %v221 = vld [vmem:[%s10 + $0x70] sm:$0xff]
    %v222 = vld [vmem:[%s10 + $0x78] sm:$0xff]
    %224 = vset.pattern.permute.xlu0 0
    %225 = vperm.xlu0 %224, %v207
    %v226 = vpop.permute.xlu0 %225
    %229 = vset.pattern.permute.xlu0 0
    %230 = vperm.xlu0 %229, %v208
    %v231 = vpop.permute.xlu0 %230
    %234 = vset.pattern.permute.xlu0 0
    %235 = vperm.xlu0 %234, %v209
    %v236 = vpop.permute.xlu0 %235
    %239 = vset.pattern.permute.xlu0 0
    %240 = vperm.xlu0 %239, %v210
    %v241 = vpop.permute.xlu0 %240
    %244 = vset.pattern.permute.xlu0 0
    %245 = vperm.xlu0 %244, %v211
    %v246 = vpop.permute.xlu0 %245
    %249 = vset.pattern.permute.xlu0 0
    %250 = vperm.xlu0 %249, %v212
    %v251 = vpop.permute.xlu0 %250
    %254 = vset.pattern.permute.xlu0 0
    %255 = vperm.xlu0 %254, %v213
    %v256 = vpop.permute.xlu0 %255
    %259 = vset.pattern.permute.xlu0 0
    %260 = vperm.xlu0 %259, %v214
    %v261 = vpop.permute.xlu0 %260
    %264 = vset.pattern.permute.xlu0 0
    %265 = vperm.xlu0 %264, %v215
    %v266 = vpop.permute.xlu0 %265
    %269 = vset.pattern.permute.xlu0 0
    %270 = vperm.xlu0 %269, %v216
    %v271 = vpop.permute.xlu0 %270
    %274 = vset.pattern.permute.xlu0 0
    %275 = vperm.xlu0 %274, %v217
    %v276 = vpop.permute.xlu0 %275
    %279 = vset.pattern.permute.xlu0 0
    %280 = vperm.xlu0 %279, %v218
    %v281 = vpop.permute.xlu0 %280
    %284 = vset.pattern.permute.xlu0 0
    %285 = vperm.xlu0 %284, %v219
    %v286 = vpop.permute.xlu0 %285
    %289 = vset.pattern.permute.xlu0 0
    %290 = vperm.xlu0 %289, %v220
    %v291 = vpop.permute.xlu0 %290
    %294 = vset.pattern.permute.xlu0 0
    %295 = vperm.xlu0 %294, %v221
    %v296 = vpop.permute.xlu0 %295
    %299 = vset.pattern.permute.xlu0 0
    %300 = vperm.xlu0 %299, %v222
    %v301 = vpop.permute.xlu0 %300
    %v304 = vsel %vm149, %v191, 0
    %v307 = vsel %vm149, %v192, 0
    %v310 = vsel %vm149, %v193, 0
    %v313 = vsel %vm149, %v194, 0
    %v316 = vsel %vm149, %v195, 0
    %v319 = vsel %vm149, %v196, 0
    %v322 = vsel %vm149, %v197, 0
    %v325 = vsel %vm149, %v198, 0
    %v328 = vsel %vm149, %v199, 0
    %v331 = vsel %vm149, %v200, 0
    %v334 = vsel %vm149, %v201, 0
    %v337 = vsel %vm149, %v202, 0
    %v340 = vsel %vm149, %v203, 0
    %v343 = vsel %vm149, %v204, 0
    %v346 = vsel %vm149, %v205, 0
    %v349 = vsel %vm149, %v206, 0
    %351 = vmatpush.msra.mxu0 0.0
    %352 = vmatpush.msra.mxu0 0.0
    %353 = vmatpush.msra.mxu0 0.0
    %354 = vmatpush.msra.mxu0 0.0
    %355 = vmatpush.msra.mxu0 0.0
    %356 = vmatpush.msra.mxu0 0.0
    %357 = vmatpush.msra.mxu0 0.0
    %358 = vmatpush.msra.mxu0 0.0
    %359 = vmatpush.msra.mxu0 0.0
    %360 = vmatpush.msra.mxu0 0.0
    %361 = vmatpush.msra.mxu0 0.0
    %362 = vmatpush.msra.mxu0 0.0
    %363 = vmatpush.msra.mxu0 %v189
    %364 = vmatpush.msra.mxu0 %v186
    %365 = vmatpush.msra.mxu0 %v183
    %366 = vmatpush.msra.mxu0 %v180
    %367 = vmatmul.f32.gmra.mxu0 %v304
    %v368 = vpop.f32.mrf.mxu0
    %v369 = vadd.f32 %v226, %v368
    %370 = vmatmul.f32.gmra.mxu0 %v307
    %v371 = vpop.f32.mrf.mxu0
    %v372 = vadd.f32 %v231, %v371
    %373 = vmatmul.f32.gmra.mxu0 %v310
    %v374 = vpop.f32.mrf.mxu0
    %v375 = vadd.f32 %v236, %v374
    %376 = vmatmul.f32.gmra.mxu0 %v313
    %v377 = vpop.f32.mrf.mxu0
    %v378 = vadd.f32 %v241, %v377
    %379 = vmatmul.f32.gmra.mxu0 %v316
    %v380 = vpop.f32.mrf.mxu0
    %v381 = vadd.f32 %v246, %v380
    %382 = vmatmul.f32.gmra.mxu0 %v319
    %v383 = vpop.f32.mrf.mxu0
    %v384 = vadd.f32 %v251, %v383
    %385 = vmatmul.f32.gmra.mxu0 %v322
    %v386 = vpop.f32.mrf.mxu0
    %v387 = vadd.f32 %v256, %v386
    %388 = vmatmul.f32.gmra.mxu0 %v325
    %v389 = vpop.f32.mrf.mxu0
    %v390 = vadd.f32 %v261, %v389
    %391 = vmatmul.f32.gmra.mxu0 %v328
    %v392 = vpop.f32.mrf.mxu0
    %v393 = vadd.f32 %v266, %v392
    %394 = vmatmul.f32.gmra.mxu0 %v331
    %v395 = vpop.f32.mrf.mxu0
    %v396 = vadd.f32 %v271, %v395
    %397 = vmatmul.f32.gmra.mxu0 %v334
    %v398 = vpop.f32.mrf.mxu0
    %v399 = vadd.f32 %v276, %v398
    %400 = vmatmul.f32.gmra.mxu0 %v337
    %v401 = vpop.f32.mrf.mxu0
    %v402 = vadd.f32 %v281, %v401
    %403 = vmatmul.f32.gmra.mxu0 %v340
    %v404 = vpop.f32.mrf.mxu0
    %v405 = vadd.f32 %v286, %v404
    %406 = vmatmul.f32.gmra.mxu0 %v343
    %v407 = vpop.f32.mrf.mxu0
    %v408 = vadd.f32 %v291, %v407
    %409 = vmatmul.f32.gmra.mxu0 %v346
    %v410 = vpop.f32.mrf.mxu0
    %v411 = vadd.f32 %v296, %v410
    %412 = vmatmul.f32.gmra.mxu0 %v349
    %v413 = vpop.f32.mrf.mxu0
    %v414 = vadd.f32 %v301, %v413
    %415 = vdwg.mxu0
    %416 = vst.msk [vmem:[%s12] sm:$0xff] %vm75, %v369
    %417 = vst.msk [vmem:[%s12 + $0x8] sm:$0xff] %vm75, %v372
    %418 = vst.msk [vmem:[%s12 + $0x10] sm:$0xff] %vm75, %v375
    %419 = vst.msk [vmem:[%s12 + $0x18] sm:$0xff] %vm75, %v378
    %420 = vst.msk [vmem:[%s12 + $0x20] sm:$0xff] %vm75, %v381
    %421 = vst.msk [vmem:[%s12 + $0x28] sm:$0xff] %vm75, %v384
    %422 = vst.msk [vmem:[%s12 + $0x30] sm:$0xff] %vm75, %v387
    %423 = vst.msk [vmem:[%s12 + $0x38] sm:$0xff] %vm75, %v390
    %424 = vst.msk [vmem:[%s12 + $0x40] sm:$0xff] %vm75, %v393
    %425 = vst.msk [vmem:[%s12 + $0x48] sm:$0xff] %vm75, %v396
    %426 = vst.msk [vmem:[%s12 + $0x50] sm:$0xff] %vm75, %v399
    %427 = vst.msk [vmem:[%s12 + $0x58] sm:$0xff] %vm75, %v402
    %428 = vst.msk [vmem:[%s12 + $0x60] sm:$0xff] %vm75, %v405
    %429 = vst.msk [vmem:[%s12 + $0x68] sm:$0xff] %vm75, %v408
    %430 = vst.msk [vmem:[%s12 + $0x70] sm:$0xff] %vm75, %v411
    %431 = vst.msk [vmem:[%s12 + $0x78] sm:$0xff] %vm75, %v414
    %432 = vst.msk [vmem:[#allocation2] sm:$0xff] %vm75, -inf
    %433 = vst.msk [vmem:[#allocation2 + $0x8] sm:$0xff] %vm75, -inf
    %434 = vst.msk [vmem:[#allocation2 + $0x10] sm:$0xff] %vm75, -inf
    %435 = vst.msk [vmem:[#allocation2 + $0x18] sm:$0xff] %vm75, -inf
  $region53: #{tpu_custom_call.1} parent=0 // pred_fallthru
    _
  %v436 = vld [vmem:[%s1] sm:$0xff]
  %v437 = vld [vmem:[%s1 + $0x8] sm:$0xff]
  %v438 = vld [vmem:[%s2] sm:$0xf]
  %v439 = vld [vmem:[%s2 + $0x4] sm:$0xf]
  %v440 = vld [vmem:[%s2 + $0x8] sm:$0xf]
  %v441 = vld [vmem:[%s2 + $0xc] sm:$0xf]
  %v446 = vunpack.c.l.b16 %v438
  %v447 = vunpack.c.l.b16 %v439
  %v448 = vunpack.c.l.b16 %v440
  %v449 = vunpack.c.l.b16 %v441
  %v450 = vpack.c.b16 %v447, %v446
  %v451 = vpack.c.b16 %v449, %v448
  %453 = vst [vmem:[#allocation1] ss:$4 sm:$0xff] %v436
  %s455 = scalar_lea.vmem [#allocation1], 32
  %456 = vst [vmem:[%s455] ss:$4 sm:$0xff] %v437
  %v457 = vld.sshfl [vmem:[#allocation1] sm:$0xff pattern:$0x73625140]
  %v458 = vld.sshfl [vmem:[#allocation1 + $0x8] sm:$0xff pattern:$0x73625140]
  %v459 = vld.sshfl [vmem:[#allocation1 + $0x10] sm:$0xff pattern:$0x73625140]
  %v460 = vld.sshfl [vmem:[#allocation1 + $0x18] sm:$0xff pattern:$0x73625140]
  %v461 = vld.sshfl [vmem:[#allocation1 + $0x20] sm:$0xff pattern:$0x73625140]
  %v462 = vld.sshfl [vmem:[#allocation1 + $0x28] sm:$0xff pattern:$0x73625140]
  %v463 = vld.sshfl [vmem:[#allocation1 + $0x30] sm:$0xff pattern:$0x73625140]
  %v464 = vld.sshfl [vmem:[#allocation1 + $0x38] sm:$0xff pattern:$0x73625140]
  %vm465 = vcmask 31744
  %v467 = vsel %vm465, %v450, 0
  %v470 = vsel %vm465, %v451, 0
  %vm472 = vcmask 1041408
  %v473 = vsel %vm472, %v457, 0
  %v475 = vsel %vm472, %v458, 0
  %v477 = vsel %vm472, %v459, 0
  %v479 = vsel %vm472, %v460, 0
  %v481 = vsel %vm472, %v461, 0
  %v483 = vsel %vm472, %v462, 0
  %v485 = vsel %vm472, %v463, 0
  %v487 = vsel %vm472, %v464, 0
  %489 = vmatpush.bf16.msra.mxu0 0
  %490 = vmatpush.bf16.msra.mxu0 0
  %491 = vmatpush.bf16.msra.mxu0 0
  %492 = vmatpush.bf16.msra.mxu0 0
  %493 = vmatpush.bf16.msra.mxu0 0
  %494 = vmatpush.bf16.msra.mxu0 0
  %495 = vmatpush.bf16.msra.mxu0 0
  %496 = vmatpush.bf16.msra.mxu0 %v473
  %497 = vmatmul.bf16.gmra.mxu0 %v467
  %v498 = vpop.f32.mrf.mxu0
  %v499 = vadd.f32 0.0, %v498
  %v500 = vpop.f32.mrf.mxu0
  %v501 = vadd.f32 0.0, %v500
  %502 = vmatmul.bf16.gmra.mxu0 %v470
  %v503 = vpop.f32.mrf.mxu0
  %v504 = vadd.f32 0.0, %v503
  %v505 = vpop.f32.mrf.mxu0
  %v506 = vadd.f32 0.0, %v505
  %507 = vdwg.mxu0
  %508 = vmatpush.bf16.msra.mxu0 0
  %509 = vmatpush.bf16.msra.mxu0 0
  %510 = vmatpush.bf16.msra.mxu0 0
  %511 = vmatpush.bf16.msra.mxu0 0
  %512 = vmatpush.bf16.msra.mxu0 0
  %513 = vmatpush.bf16.msra.mxu0 0
  %514 = vmatpush.bf16.msra.mxu0 0
  %515 = vmatpush.bf16.msra.mxu0 %v475
  %516 = vmatmul.bf16.gmra.mxu0 %v467
  %v517 = vpop.f32.mrf.mxu0
  %v518 = vadd.f32 0.0, %v517
  %v519 = vpop.f32.mrf.mxu0
  %v520 = vadd.f32 0.0, %v519
  %521 = vmatmul.bf16.gmra.mxu0 %v470
  %v522 = vpop.f32.mrf.mxu0
  %v523 = vadd.f32 0.0, %v522
  %v524 = vpop.f32.mrf.mxu0
  %v525 = vadd.f32 0.0, %v524
  %526 = vdwg.mxu0
  %527 = vmatpush.bf16.msra.mxu0 0
  %528 = vmatpush.bf16.msra.mxu0 0
  %529 = vmatpush.bf16.msra.mxu0 0
  %530 = vmatpush.bf16.msra.mxu0 0
  %531 = vmatpush.bf16.msra.mxu0 0
  %532 = vmatpush.bf16.msra.mxu0 0
  %533 = vmatpush.bf16.msra.mxu0 0
  %534 = vmatpush.bf16.msra.mxu0 %v477
  %535 = vmatmul.bf16.gmra.mxu0 %v467
  %v536 = vpop.f32.mrf.mxu0
  %v537 = vadd.f32 0.0, %v536
  %v538 = vpop.f32.mrf.mxu0
  %v539 = vadd.f32 0.0, %v538
  %540 = vmatmul.bf16.gmra.mxu0 %v470
  %v541 = vpop.f32.mrf.mxu0
  %v542 = vadd.f32 0.0, %v541
  %v543 = vpop.f32.mrf.mxu0
  %v544 = vadd.f32 0.0, %v543
  %545 = vdwg.mxu0
  %546 = vmatpush.bf16.msra.mxu0 0
  %547 = vmatpush.bf16.msra.mxu0 0
  %548 = vmatpush.bf16.msra.mxu0 0
  %549 = vmatpush.bf16.msra.mxu0 0
  %550 = vmatpush.bf16.msra.mxu0 0
  %551 = vmatpush.bf16.msra.mxu0 0
  %552 = vmatpush.bf16.msra.mxu0 0
  %553 = vmatpush.bf16.msra.mxu0 %v479
  %554 = vmatmul.bf16.gmra.mxu0 %v467
  %v555 = vpop.f32.mrf.mxu0
  %v556 = vadd.f32 0.0, %v555
  %v557 = vpop.f32.mrf.mxu0
  %v558 = vadd.f32 0.0, %v557
  %559 = vmatmul.bf16.gmra.mxu0 %v470
  %v560 = vpop.f32.mrf.mxu0
  %v561 = vadd.f32 0.0, %v560
  %v562 = vpop.f32.mrf.mxu0
  %v563 = vadd.f32 0.0, %v562
  %564 = vdwg.mxu0
  %565 = vmatpush.bf16.msra.mxu0 0
  %566 = vmatpush.bf16.msra.mxu0 0
  %567 = vmatpush.bf16.msra.mxu0 0
  %568 = vmatpush.bf16.msra.mxu0 0
  %569 = vmatpush.bf16.msra.mxu0 0
  %570 = vmatpush.bf16.msra.mxu0 0
  %571 = vmatpush.bf16.msra.mxu0 0
  %572 = vmatpush.bf16.msra.mxu0 %v481
  %573 = vmatmul.bf16.gmra.mxu0 %v467
  %v574 = vpop.f32.mrf.mxu0
  %v575 = vadd.f32 0.0, %v574
  %v576 = vpop.f32.mrf.mxu0
  %v577 = vadd.f32 0.0, %v576
  %578 = vmatmul.bf16.gmra.mxu0 %v470
  %v579 = vpop.f32.mrf.mxu0
  %v580 = vadd.f32 0.0, %v579
  %v581 = vpop.f32.mrf.mxu0
  %v582 = vadd.f32 0.0, %v581
  %583 = vdwg.mxu0
  %584 = vmatpush.bf16.msra.mxu0 0
  %585 = vmatpush.bf16.msra.mxu0 0
  %586 = vmatpush.bf16.msra.mxu0 0
  %587 = vmatpush.bf16.msra.mxu0 0
  %588 = vmatpush.bf16.msra.mxu0 0
  %589 = vmatpush.bf16.msra.mxu0 0
  %590 = vmatpush.bf16.msra.mxu0 0
  %591 = vmatpush.bf16.msra.mxu0 %v483
  %592 = vmatmul.bf16.gmra.mxu0 %v467
  %v593 = vpop.f32.mrf.mxu0
  %v594 = vadd.f32 0.0, %v593
  %v595 = vpop.f32.mrf.mxu0
  %v596 = vadd.f32 0.0, %v595
  %597 = vmatmul.bf16.gmra.mxu0 %v470
  %v598 = vpop.f32.mrf.mxu0
  %v599 = vadd.f32 0.0, %v598
  %v600 = vpop.f32.mrf.mxu0
  %v601 = vadd.f32 0.0, %v600
  %602 = vdwg.mxu0
  %603 = vmatpush.bf16.msra.mxu0 0
  %604 = vmatpush.bf16.msra.mxu0 0
  %605 = vmatpush.bf16.msra.mxu0 0
  %606 = vmatpush.bf16.msra.mxu0 0
  %607 = vmatpush.bf16.msra.mxu0 0
  %608 = vmatpush.bf16.msra.mxu0 0
  %609 = vmatpush.bf16.msra.mxu0 0
  %610 = vmatpush.bf16.msra.mxu0 %v485
  %611 = vmatmul.bf16.gmra.mxu0 %v467
  %v612 = vpop.f32.mrf.mxu0
  %v613 = vadd.f32 0.0, %v612
  %v614 = vpop.f32.mrf.mxu0
  %v615 = vadd.f32 0.0, %v614
  %616 = vmatmul.bf16.gmra.mxu0 %v470
  %v617 = vpop.f32.mrf.mxu0
  %v618 = vadd.f32 0.0, %v617
  %v619 = vpop.f32.mrf.mxu0
  %v620 = vadd.f32 0.0, %v619
  %621 = vdwg.mxu0
  %622 = vmatpush.bf16.msra.mxu0 0
  %623 = vmatpush.bf16.msra.mxu0 0
  %624 = vmatpush.bf16.msra.mxu0 0
  %625 = vmatpush.bf16.msra.mxu0 0
  %626 = vmatpush.bf16.msra.mxu0 0
  %627 = vmatpush.bf16.msra.mxu0 0
  %628 = vmatpush.bf16.msra.mxu0 0
  %629 = vmatpush.bf16.msra.mxu0 %v487
  %630 = vmatmul.bf16.gmra.mxu0 %v467
  %v631 = vpop.f32.mrf.mxu0
  %v632 = vadd.f32 0.0, %v631
  %v633 = vpop.f32.mrf.mxu0
  %v634 = vadd.f32 0.0, %v633
  %635 = vmatmul.bf16.gmra.mxu0 %v470
  %v636 = vpop.f32.mrf.mxu0
  %v637 = vadd.f32 0.0, %v636
  %v638 = vpop.f32.mrf.mxu0
  %v639 = vadd.f32 0.0, %v638
  %640 = vdwg.mxu0
  %v641 = vmax.f32 %v499, 0.0
  %v642 = vmax.f32 %v518, 0.0
  %v643 = vmax.f32 %v537, 0.0
  %v644 = vmax.f32 %v556, 0.0
  %v645 = vmax.f32 %v575, 0.0
  %v646 = vmax.f32 %v594, 0.0
  %v647 = vmax.f32 %v613, 0.0
  %v648 = vmax.f32 %v632, 0.0
  %v649 = vmax.f32 %v501, 0.0
  %v650 = vmax.f32 %v520, 0.0
  %v651 = vmax.f32 %v539, 0.0
  %v652 = vmax.f32 %v558, 0.0
  %v653 = vmax.f32 %v577, 0.0
  %v654 = vmax.f32 %v596, 0.0
  %v655 = vmax.f32 %v615, 0.0
  %v656 = vmax.f32 %v634, 0.0
  %v657 = vmax.f32 %v504, 0.0
  %v658 = vmax.f32 %v523, 0.0
  %v659 = vmax.f32 %v542, 0.0
  %v660 = vmax.f32 %v561, 0.0
  %v661 = vmax.f32 %v580, 0.0
  %v662 = vmax.f32 %v599, 0.0
  %v663 = vmax.f32 %v618, 0.0
  %v664 = vmax.f32 %v637, 0.0
  %v665 = vmax.f32 %v506, 0.0
  %v666 = vmax.f32 %v525, 0.0
  %v667 = vmax.f32 %v544, 0.0
  %v668 = vmax.f32 %v563, 0.0
  %v669 = vmax.f32 %v582, 0.0
  %v670 = vmax.f32 %v601, 0.0
  %v671 = vmax.f32 %v620, 0.0
  %v672 = vmax.f32 %v639, 0.0
  %v673 = vpack.c.bf16 %v649, %v641
  %v674 = vpack.c.bf16 %v650, %v642
  %v675 = vpack.c.bf16 %v651, %v643
  %v676 = vpack.c.bf16 %v652, %v644
  %v677 = vpack.c.bf16 %v653, %v645
  %v678 = vpack.c.bf16 %v654, %v646
  %v679 = vpack.c.bf16 %v655, %v647
  %v680 = vpack.c.bf16 %v656, %v648
  %v681 = vpack.c.bf16 %v665, %v657
  %v682 = vpack.c.bf16 %v666, %v658
  %v683 = vpack.c.bf16 %v667, %v659
  %v684 = vpack.c.bf16 %v668, %v660
  %v685 = vpack.c.bf16 %v669, %v661
  %v686 = vpack.c.bf16 %v670, %v662
  %v687 = vpack.c.bf16 %v671, %v663
  %v688 = vpack.c.bf16 %v672, %v664
  %v689 = vld [vmem:[%s3] sm:$0xf]
  %v690 = vld [vmem:[%s3 + $0x4] sm:$0xf]
  %v691 = vld [vmem:[%s3 + $0x8] sm:$0xf]
  %v692 = vld [vmem:[%s3 + $0xc] sm:$0xf]
  %v697 = vunpack.c.l.b16 %v689
  %v698 = vunpack.c.l.b16 %v690
  %v699 = vunpack.c.l.b16 %v691
  %v700 = vunpack.c.l.b16 %v692
  %v701 = vpack.c.b16 %v698, %v697
  %v702 = vpack.c.b16 %v700, %v699
  %vm703 = vcmask 261120
  %v705 = vsel %vm703, %v701, 0
  %v708 = vsel %vm703, %v702, 0
  %710 = vmatpush.bf16.msra.mxu0 0
  %711 = vmatpush.bf16.msra.mxu0 0
  %712 = vmatpush.bf16.msra.mxu0 0
  %713 = vmatpush.bf16.msra.mxu0 0
  %714 = vmatpush.bf16.msra.mxu0 0
  %715 = vmatpush.bf16.msra.mxu0 0
  %716 = vmatpush.bf16.msra.mxu0 %v681
  %717 = vmatpush.bf16.msra.mxu0 %v673
  %718 = vmatmul.bf16.gmra.mxu0 %v705
  %v719 = vpop.f32.mrf.mxu0
  %v720 = vadd.f32 0.0, %v719
  %v721 = vpop.f32.mrf.mxu0
  %v722 = vadd.f32 0.0, %v721
  %723 = vmatmul.bf16.gmra.mxu0 %v708
  %v724 = vpop.f32.mrf.mxu0
  %v725 = vadd.f32 0.0, %v724
  %v726 = vpop.f32.mrf.mxu0
  %v727 = vadd.f32 0.0, %v726
  %728 = vdwg.mxu0
  %729 = vmatpush.bf16.msra.mxu0 0
  %730 = vmatpush.bf16.msra.mxu0 0
  %731 = vmatpush.bf16.msra.mxu0 0
  %732 = vmatpush.bf16.msra.mxu0 0
  %733 = vmatpush.bf16.msra.mxu0 0
  %734 = vmatpush.bf16.msra.mxu0 0
  %735 = vmatpush.bf16.msra.mxu0 %v682
  %736 = vmatpush.bf16.msra.mxu0 %v674
  %737 = vmatmul.bf16.gmra.mxu0 %v705
  %v738 = vpop.f32.mrf.mxu0
  %v739 = vadd.f32 0.0, %v738
  %v740 = vpop.f32.mrf.mxu0
  %v741 = vadd.f32 0.0, %v740
  %742 = vmatmul.bf16.gmra.mxu0 %v708
  %v743 = vpop.f32.mrf.mxu0
  %v744 = vadd.f32 0.0, %v743
  %v745 = vpop.f32.mrf.mxu0
  %v746 = vadd.f32 0.0, %v745
  %747 = vdwg.mxu0
  %748 = vmatpush.bf16.msra.mxu0 0
  %749 = vmatpush.bf16.msra.mxu0 0
  %750 = vmatpush.bf16.msra.mxu0 0
  %751 = vmatpush.bf16.msra.mxu0 0
  %752 = vmatpush.bf16.msra.mxu0 0
  %753 = vmatpush.bf16.msra.mxu0 0
  %754 = vmatpush.bf16.msra.mxu0 %v683
  %755 = vmatpush.bf16.msra.mxu0 %v675
  %756 = vmatmul.bf16.gmra.mxu0 %v705
  %v757 = vpop.f32.mrf.mxu0
  %v758 = vadd.f32 0.0, %v757
  %v759 = vpop.f32.mrf.mxu0
  %v760 = vadd.f32 0.0, %v759
  %761 = vmatmul.bf16.gmra.mxu0 %v708
  %v762 = vpop.f32.mrf.mxu0
  %v763 = vadd.f32 0.0, %v762
  %v764 = vpop.f32.mrf.mxu0
  %v765 = vadd.f32 0.0, %v764
  %766 = vdwg.mxu0
  %767 = vmatpush.bf16.msra.mxu0 0
  %768 = vmatpush.bf16.msra.mxu0 0
  %769 = vmatpush.bf16.msra.mxu0 0
  %770 = vmatpush.bf16.msra.mxu0 0
  %771 = vmatpush.bf16.msra.mxu0 0
  %772 = vmatpush.bf16.msra.mxu0 0
  %773 = vmatpush.bf16.msra.mxu0 %v684
  %774 = vmatpush.bf16.msra.mxu0 %v676
  %775 = vmatmul.bf16.gmra.mxu0 %v705
  %v776 = vpop.f32.mrf.mxu0
  %v777 = vadd.f32 0.0, %v776
  %v778 = vpop.f32.mrf.mxu0
  %v779 = vadd.f32 0.0, %v778
  %780 = vmatmul.bf16.gmra.mxu0 %v708
  %v781 = vpop.f32.mrf.mxu0
  %v782 = vadd.f32 0.0, %v781
  %v783 = vpop.f32.mrf.mxu0
  %v784 = vadd.f32 0.0, %v783
  %785 = vdwg.mxu0
  %786 = vmatpush.bf16.msra.mxu0 0
  %787 = vmatpush.bf16.msra.mxu0 0
  %788 = vmatpush.bf16.msra.mxu0 0
  %789 = vmatpush.bf16.msra.mxu0 0
  %790 = vmatpush.bf16.msra.mxu0 0
  %791 = vmatpush.bf16.msra.mxu0 0
  %792 = vmatpush.bf16.msra.mxu0 %v685
  %793 = vmatpush.bf16.msra.mxu0 %v677
  %794 = vmatmul.bf16.gmra.mxu0 %v705
  %v795 = vpop.f32.mrf.mxu0
  %v796 = vadd.f32 0.0, %v795
  %v797 = vpop.f32.mrf.mxu0
  %v798 = vadd.f32 0.0, %v797
  %799 = vmatmul.bf16.gmra.mxu0 %v708
  %v800 = vpop.f32.mrf.mxu0
  %v801 = vadd.f32 0.0, %v800
  %v802 = vpop.f32.mrf.mxu0
  %v803 = vadd.f32 0.0, %v802
  %804 = vdwg.mxu0
  %805 = vmatpush.bf16.msra.mxu0 0
  %806 = vmatpush.bf16.msra.mxu0 0
  %807 = vmatpush.bf16.msra.mxu0 0
  %808 = vmatpush.bf16.msra.mxu0 0
  %809 = vmatpush.bf16.msra.mxu0 0
  %810 = vmatpush.bf16.msra.mxu0 0
  %811 = vmatpush.bf16.msra.mxu0 %v686
  %812 = vmatpush.bf16.msra.mxu0 %v678
  %813 = vmatmul.bf16.gmra.mxu0 %v705
  %v814 = vpop.f32.mrf.mxu0
  %v815 = vadd.f32 0.0, %v814
  %v816 = vpop.f32.mrf.mxu0
  %v817 = vadd.f32 0.0, %v816
  %818 = vmatmul.bf16.gmra.mxu0 %v708
  %v819 = vpop.f32.mrf.mxu0
  %v820 = vadd.f32 0.0, %v819
  %v821 = vpop.f32.mrf.mxu0
  %v822 = vadd.f32 0.0, %v821
  %823 = vdwg.mxu0
  %824 = vmatpush.bf16.msra.mxu0 0
  %825 = vmatpush.bf16.msra.mxu0 0
  %826 = vmatpush.bf16.msra.mxu0 0
  %827 = vmatpush.bf16.msra.mxu0 0
  %828 = vmatpush.bf16.msra.mxu0 0
  %829 = vmatpush.bf16.msra.mxu0 0
  %830 = vmatpush.bf16.msra.mxu0 %v687
  %831 = vmatpush.bf16.msra.mxu0 %v679
  %832 = vmatmul.bf16.gmra.mxu0 %v705
  %v833 = vpop.f32.mrf.mxu0
  %v834 = vadd.f32 0.0, %v833
  %v835 = vpop.f32.mrf.mxu0
  %v836 = vadd.f32 0.0, %v835
  %837 = vmatmul.bf16.gmra.mxu0 %v708
  %v838 = vpop.f32.mrf.mxu0
  %v839 = vadd.f32 0.0, %v838
  %v840 = vpop.f32.mrf.mxu0
  %v841 = vadd.f32 0.0, %v840
  %842 = vdwg.mxu0
  %843 = vmatpush.bf16.msra.mxu0 0
  %844 = vmatpush.bf16.msra.mxu0 0
  %845 = vmatpush.bf16.msra.mxu0 0
  %846 = vmatpush.bf16.msra.mxu0 0
  %847 = vmatpush.bf16.msra.mxu0 0
  %848 = vmatpush.bf16.msra.mxu0 0
  %849 = vmatpush.bf16.msra.mxu0 %v688
  %850 = vmatpush.bf16.msra.mxu0 %v680
  %851 = vmatmul.bf16.gmra.mxu0 %v705
  %v852 = vpop.f32.mrf.mxu0
  %v853 = vadd.f32 0.0, %v852
  %v854 = vpop.f32.mrf.mxu0
  %v855 = vadd.f32 0.0, %v854
  %856 = vmatmul.bf16.gmra.mxu0 %v708
  %v857 = vpop.f32.mrf.mxu0
  %v858 = vadd.f32 0.0, %v857
  %v859 = vpop.f32.mrf.mxu0
  %v860 = vadd.f32 0.0, %v859
  %861 = vdwg.mxu0
  %v862 = vmax.f32 %v720, %v796
  %v863 = vmax.f32 %v739, %v815
  %v864 = vmax.f32 %v758, %v834
  %v865 = vmax.f32 %v777, %v853
  %v866 = vmax.f32 %v722, %v798
  %v867 = vmax.f32 %v741, %v817
  %v868 = vmax.f32 %v760, %v836
  %v869 = vmax.f32 %v779, %v855
  %v870 = vmax.f32 %v725, %v801
  %v871 = vmax.f32 %v744, %v820
  %v872 = vmax.f32 %v763, %v839
  %v873 = vmax.f32 %v782, %v858
  %v874 = vmax.f32 %v727, %v803
  %v875 = vmax.f32 %v746, %v822
  %v876 = vmax.f32 %v765, %v841
  %v877 = vmax.f32 %v784, %v860
  %v878 = vmax.f32 %v862, %v864
  %v879 = vmax.f32 %v863, %v865
  %v880 = vmax.f32 %v866, %v868
  %v881 = vmax.f32 %v867, %v869
  %v882 = vmax.f32 %v870, %v872
  %v883 = vmax.f32 %v871, %v873
  %v884 = vmax.f32 %v874, %v876
  %v885 = vmax.f32 %v875, %v877
  %v886 = vmax.f32 %v878, %v879
  %v887 = vmax.f32 %v880, %v881
  %v888 = vmax.f32 %v882, %v883
  %v889 = vmax.f32 %v884, %v885
  %894 = vrot.lane.b32.xlu0 %v886, 64
  %v895 = vpop.permute.xlu0 %894
  %896 = vrot.lane.b32.xlu0 %v887, 64
  %v897 = vpop.permute.xlu0 %896
  %898 = vrot.lane.b32.xlu0 %v888, 64
  %v899 = vpop.permute.xlu0 %898
  %900 = vrot.lane.b32.xlu0 %v889, 64
  %v901 = vpop.permute.xlu0 %900
  %v906 = vmax.f32 %v886, %v895
  %v907 = vmax.f32 %v887, %v897
  %v908 = vmax.f32 %v888, %v899
  %v909 = vmax.f32 %v889, %v901
  %914 = vrot.lane.b32.xlu0 %v906, 96
  %v915 = vpop.permute.xlu0 %914
  %916 = vrot.lane.b32.xlu0 %v907, 96
  %v917 = vpop.permute.xlu0 %916
  %918 = vrot.lane.b32.xlu0 %v908, 96
  %v919 = vpop.permute.xlu0 %918
  %920 = vrot.lane.b32.xlu0 %v909, 96
  %v921 = vpop.permute.xlu0 %920
  %v926 = vmax.f32 %v906, %v915
  %v927 = vmax.f32 %v907, %v917
  %v928 = vmax.f32 %v908, %v919
  %v929 = vmax.f32 %v909, %v921
  %934 = vrot.lane.b32.xlu0 %v926, 112
  %v935 = vpop.permute.xlu0 %934
  %936 = vrot.lane.b32.xlu0 %v927, 112
  %v937 = vpop.permute.xlu0 %936
  %938 = vrot.lane.b32.xlu0 %v928, 112
  %v939 = vpop.permute.xlu0 %938
  %940 = vrot.lane.b32.xlu0 %v929, 112
  %v941 = vpop.permute.xlu0 %940
  %v946 = vmax.f32 %v926, %v935
  %v947 = vmax.f32 %v927, %v937
  %v948 = vmax.f32 %v928, %v939
  %v949 = vmax.f32 %v929, %v941
  %954 = vrot.lane.b32.xlu0 %v946, 120
  %v955 = vpop.permute.xlu0 %954
  %956 = vrot.lane.b32.xlu0 %v947, 120
  %v957 = vpop.permute.xlu0 %956
  %958 = vrot.lane.b32.xlu0 %v948, 120
  %v959 = vpop.permute.xlu0 %958
  %960 = vrot.lane.b32.xlu0 %v949, 120
  %v961 = vpop.permute.xlu0 %960
  %v966 = vmax.f32 %v946, %v955
  %v967 = vmax.f32 %v947, %v957
  %v968 = vmax.f32 %v948, %v959
  %v969 = vmax.f32 %v949, %v961
  %v970 = vld [vmem:[#allocation2] sm:$0xff]
  %v971 = vld [vmem:[#allocation2 + $0x8] sm:$0xff]
  %v972 = vld [vmem:[#allocation2 + $0x10] sm:$0xff]
  %v973 = vld [vmem:[#allocation2 + $0x18] sm:$0xff]
  %v974 = vmax.f32 %v970, %v966
  %v975 = vmax.f32 %v971, %v967
  %v976 = vmax.f32 %v972, %v968
  %v977 = vmax.f32 %v973, %v969
  %vm978 = vcmask 64512
  %979 = vst.msk [vmem:[#allocation2] sm:$0xff] %vm978, %v974
  %980 = vst.msk [vmem:[#allocation2 + $0x8] sm:$0xff] %vm978, %v975
  %981 = vst.msk [vmem:[#allocation2 + $0x10] sm:$0xff] %vm978, %v976
  %982 = vst.msk [vmem:[#allocation2 + $0x18] sm:$0xff] %vm978, %v977
  // Predicated region
  $region54: #{tpu_custom_call.1} parent=0 // pred_check
    %p983 = pneg %p42
  $region55: #{tpu_custom_call.1} parent=0 // pred_check_branch
    %985 = sbr.rel (%p983) target = $region57
  $region56: #{tpu_custom_call.1} parent=0 // pred_region
    %v986 = vld [vmem:[#allocation2] sm:$0xff]
    %v987 = vld [vmem:[#allocation2 + $0x8] sm:$0xff]
    %v988 = vld [vmem:[#allocation2 + $0x10] sm:$0xff]
    %v989 = vld [vmem:[#allocation2 + $0x18] sm:$0xff]
    %v990 = vld [vmem:[%s11] sm:$0xff]
    %v991 = vld [vmem:[%s11 + $0x8] sm:$0xff]
    %v992 = vld [vmem:[%s11 + $0x10] sm:$0xff]
    %v993 = vld [vmem:[%s11 + $0x18] sm:$0xff]
    %995 = vset.pattern.permute.xlu0 0
    %996 = vperm.xlu0 %995, %v990
    %v997 = vpop.permute.xlu0 %996
    %1000 = vset.pattern.permute.xlu0 0
    %1001 = vperm.xlu0 %1000, %v991
    %v1002 = vpop.permute.xlu0 %1001
    %1005 = vset.pattern.permute.xlu0 0
    %1006 = vperm.xlu0 %1005, %v992
    %v1007 = vpop.permute.xlu0 %1006
    %1010 = vset.pattern.permute.xlu0 0
    %1011 = vperm.xlu0 %1010, %v993
    %v1012 = vpop.permute.xlu0 %1011
    %v1014 = vadd.f32 %v986, %v997
    %v1015 = vadd.f32 %v987, %v1002
    %v1016 = vadd.f32 %v988, %v1007
    %v1017 = vadd.f32 %v989, %v1012
    %v1018 = vld [vmem:[%s12] sm:$0xff]
    %v1019 = vld [vmem:[%s12 + $0x8] sm:$0xff]
    %v1020 = vld [vmem:[%s12 + $0x10] sm:$0xff]
    %v1021 = vld [vmem:[%s12 + $0x18] sm:$0xff]
    %v1022 = vld [vmem:[%s12 + $0x20] sm:$0xff]
    %v1023 = vld [vmem:[%s12 + $0x28] sm:$0xff]
    %v1024 = vld [vmem:[%s12 + $0x30] sm:$0xff]
    %v1025 = vld [vmem:[%s12 + $0x38] sm:$0xff]
    %v1026 = vld [vmem:[%s12 + $0x40] sm:$0xff]
    %v1027 = vld [vmem:[%s12 + $0x48] sm:$0xff]
    %v1028 = vld [vmem:[%s12 + $0x50] sm:$0xff]
    %v1029 = vld [vmem:[%s12 + $0x58] sm:$0xff]
    %v1030 = vld [vmem:[%s12 + $0x60] sm:$0xff]
    %v1031 = vld [vmem:[%s12 + $0x68] sm:$0xff]
    %v1032 = vld [vmem:[%s12 + $0x70] sm:$0xff]
    %v1033 = vld [vmem:[%s12 + $0x78] sm:$0xff]
    %v1034 = vld [vmem:[%s9] sm:$0xff]
    %v1035 = vld [vmem:[%s9 + $0x8] sm:$0xff]
    %v1036 = vld [vmem:[%s9 + $0x10] sm:$0xff]
    %v1037 = vld [vmem:[%s9 + $0x18] sm:$0xff]
    %v1038 = vld [vmem:[%s9 + $0x20] sm:$0xff]
    %v1039 = vld [vmem:[%s9 + $0x28] sm:$0xff]
    %v1040 = vld [vmem:[%s9 + $0x30] sm:$0xff]
    %v1041 = vld [vmem:[%s9 + $0x38] sm:$0xff]
    %v1042 = vld [vmem:[%s9 + $0x40] sm:$0xff]
    %v1043 = vld [vmem:[%s9 + $0x48] sm:$0xff]
    %v1044 = vld [vmem:[%s9 + $0x50] sm:$0xff]
    %v1045 = vld [vmem:[%s9 + $0x58] sm:$0xff]
    %v1046 = vld [vmem:[%s9 + $0x60] sm:$0xff]
    %v1047 = vld [vmem:[%s9 + $0x68] sm:$0xff]
    %v1048 = vld [vmem:[%s9 + $0x70] sm:$0xff]
    %v1049 = vld [vmem:[%s9 + $0x78] sm:$0xff]
    %v1051 = vsel %vm703, %v1034, 0
    %v1054 = vsel %vm703, %v1035, 0
    %v1057 = vsel %vm703, %v1036, 0
    %v1060 = vsel %vm703, %v1037, 0
    %v1063 = vsel %vm703, %v1038, 0
    %v1066 = vsel %vm703, %v1039, 0
    %v1069 = vsel %vm703, %v1040, 0
    %v1072 = vsel %vm703, %v1041, 0
    %v1075 = vsel %vm703, %v1042, 0
    %v1078 = vsel %vm703, %v1043, 0
    %v1081 = vsel %vm703, %v1044, 0
    %v1084 = vsel %vm703, %v1045, 0
    %v1087 = vsel %vm703, %v1046, 0
    %v1090 = vsel %vm703, %v1047, 0
    %v1093 = vsel %vm703, %v1048, 0
    %v1096 = vsel %vm703, %v1049, 0
    %1098 = vmatpush.msra.mxu0 0.0
    %1099 = vmatpush.msra.mxu0 0.0
    %1100 = vmatpush.msra.mxu0 0.0
    %1101 = vmatpush.msra.mxu0 0.0
    %1102 = vmatpush.msra.mxu0 0.0
    %1103 = vmatpush.msra.mxu0 0.0
    %1104 = vmatpush.msra.mxu0 0.0
    %1105 = vmatpush.msra.mxu0 0.0
    %1106 = vmatpush.msra.mxu0 0.0
    %1107 = vmatpush.msra.mxu0 0.0
    %1108 = vmatpush.msra.mxu0 0.0
    %1109 = vmatpush.msra.mxu0 0.0
    %1110 = vmatpush.msra.mxu0 %v1017
    %1111 = vmatpush.msra.mxu0 %v1016
    %1112 = vmatpush.msra.mxu0 %v1015
    %1113 = vmatpush.msra.mxu0 %v1014
    %1114 = vmatmul.f32.gmra.mxu0 %v1051
    %v1115 = vpop.f32.mrf.mxu0
    %v1116 = vadd.f32 0.0, %v1115
    %1117 = vmatmul.f32.gmra.mxu0 %v1054
    %v1118 = vpop.f32.mrf.mxu0
    %v1119 = vadd.f32 0.0, %v1118
    %1120 = vmatmul.f32.gmra.mxu0 %v1057
    %v1121 = vpop.f32.mrf.mxu0
    %v1122 = vadd.f32 0.0, %v1121
    %1123 = vmatmul.f32.gmra.mxu0 %v1060
    %v1124 = vpop.f32.mrf.mxu0
    %v1125 = vadd.f32 0.0, %v1124
    %1126 = vmatmul.f32.gmra.mxu0 %v1063
    %v1127 = vpop.f32.mrf.mxu0
    %v1128 = vadd.f32 0.0, %v1127
    %1129 = vmatmul.f32.gmra.mxu0 %v1066
    %v1130 = vpop.f32.mrf.mxu0
    %v1131 = vadd.f32 0.0, %v1130
    %1132 = vmatmul.f32.gmra.mxu0 %v1069
    %v1133 = vpop.f32.mrf.mxu0
    %v1134 = vadd.f32 0.0, %v1133
    %1135 = vmatmul.f32.gmra.mxu0 %v1072
    %v1136 = vpop.f32.mrf.mxu0
    %v1137 = vadd.f32 0.0, %v1136
    %1138 = vmatmul.f32.gmra.mxu0 %v1075
    %v1139 = vpop.f32.mrf.mxu0
    %v1140 = vadd.f32 0.0, %v1139
    %1141 = vmatmul.f32.gmra.mxu0 %v1078
    %v1142 = vpop.f32.mrf.mxu0
    %v1143 = vadd.f32 0.0, %v1142
    %1144 = vmatmul.f32.gmra.mxu0 %v1081
    %v1145 = vpop.f32.mrf.mxu0
    %v1146 = vadd.f32 0.0, %v1145
    %1147 = vmatmul.f32.gmra.mxu0 %v1084
    %v1148 = vpop.f32.mrf.mxu0
    %v1149 = vadd.f32 0.0, %v1148
    %1150 = vmatmul.f32.gmra.mxu0 %v1087
    %v1151 = vpop.f32.mrf.mxu0
    %v1152 = vadd.f32 0.0, %v1151
    %1153 = vmatmul.f32.gmra.mxu0 %v1090
    %v1154 = vpop.f32.mrf.mxu0
    %v1155 = vadd.f32 0.0, %v1154
    %1156 = vmatmul.f32.gmra.mxu0 %v1093
    %v1157 = vpop.f32.mrf.mxu0
    %v1158 = vadd.f32 0.0, %v1157
    %1159 = vmatmul.f32.gmra.mxu0 %v1096
    %v1160 = vpop.f32.mrf.mxu0
    %v1161 = vadd.f32 0.0, %v1160
    %1162 = vdwg.mxu0
    %v1163 = vadd.f32 %v1018, %v1116
    %v1164 = vadd.f32 %v1019, %v1119
    %v1165 = vadd.f32 %v1020, %v1122
    %v1166 = vadd.f32 %v1021, %v1125
    %v1167 = vadd.f32 %v1022, %v1128
    %v1168 = vadd.f32 %v1023, %v1131
    %v1169 = vadd.f32 %v1024, %v1134
    %v1170 = vadd.f32 %v1025, %v1137
    %v1171 = vadd.f32 %v1026, %v1140
    %v1172 = vadd.f32 %v1027, %v1143
    %v1173 = vadd.f32 %v1028, %v1146
    %v1174 = vadd.f32 %v1029, %v1149
    %v1175 = vadd.f32 %v1030, %v1152
    %v1176 = vadd.f32 %v1031, %v1155
    %v1177 = vadd.f32 %v1032, %v1158
    %v1178 = vadd.f32 %v1033, %v1161
    %1179 = vst.msk [vmem:[%s12] sm:$0xff] %vm978, %v1163
    %1180 = vst.msk [vmem:[%s12 + $0x8] sm:$0xff] %vm978, %v1164
    %1181 = vst.msk [vmem:[%s12 + $0x10] sm:$0xff] %vm978, %v1165
    %1182 = vst.msk [vmem:[%s12 + $0x18] sm:$0xff] %vm978, %v1166
    %1183 = vst.msk [vmem:[%s12 + $0x20] sm:$0xff] %vm978, %v1167
    %1184 = vst.msk [vmem:[%s12 + $0x28] sm:$0xff] %vm978, %v1168
    %1185 = vst.msk [vmem:[%s12 + $0x30] sm:$0xff] %vm978, %v1169
    %1186 = vst.msk [vmem:[%s12 + $0x38] sm:$0xff] %vm978, %v1170
    %1187 = vst.msk [vmem:[%s12 + $0x40] sm:$0xff] %vm978, %v1171
    %1188 = vst.msk [vmem:[%s12 + $0x48] sm:$0xff] %vm978, %v1172
    %1189 = vst.msk [vmem:[%s12 + $0x50] sm:$0xff] %vm978, %v1173
    %1190 = vst.msk [vmem:[%s12 + $0x58] sm:$0xff] %vm978, %v1174
    %1191 = vst.msk [vmem:[%s12 + $0x60] sm:$0xff] %vm978, %v1175
    %1192 = vst.msk [vmem:[%s12 + $0x68] sm:$0xff] %vm978, %v1176
    %1193 = vst.msk [vmem:[%s12 + $0x70] sm:$0xff] %vm978, %v1177
    %1194 = vst.msk [vmem:[%s12 + $0x78] sm:$0xff] %vm978, %v1178
  $region57: #{tpu_custom_call.1} parent=0 // pred_fallthru
    _
  // Predicated region
  $region58: #{tpu_custom_call.1} parent=0 // pred_check
    _
  $region59: #{tpu_custom_call.1} parent=0 // pred_check_branch
    %1196 = sbr.rel (0) target = $region61
  $region60: #{tpu_custom_call.1} parent=0 // pred_region
    _
  $region61: #{tpu_custom_call.1} parent=0 // pred_fallthru
    _
  // Predicated region
  $region62: #{tpu_custom_call.1} parent=0 // pred_check
    _
  $region63: #{tpu_custom_call.1} parent=0 // pred_check_branch
    %1198 = sbr.rel (0) target = $region65
  $region64: #{tpu_custom_call.1} parent=0 // pred_region
    _
  $region65: #{tpu_custom_call.1} parent=0 // pred_fallthru
    _

</llo_original>
